<compile_context>
chip_gen: v7x
topology: tpu7x:2x2x1
jax: 0.10.0
libtpu: 0.0.40
codegen_flags: <defaults>
</compile_context>

<pallas_src>
import numpy as np
import jax
import jax.numpy as jnp
from jax.experimental import pallas as pl
from jax.experimental.pallas import tpu as pltpu

EPS = 1e-5


# ----------------------------- fused Pallas kernel --------------------------

def _make_bottleneck_kernel(h, w):
    hw = h * w

    def kernel(x_ref, w1_ref, b1_ref, w2_ref, b2_ref, w3_ref, b3_ref, o_ref,
               patches_ref):
        # x_ref      : (ipb, Cin, HW)   bf16  images of this block
        # w1_ref     : (C1, Cin)        bf16  (BN1 scale folded in)
        # b1_ref     : (C1, 1)          f32
        # w2_ref     : (C2, 9*C1p)      bf16  (BN2 scale folded in, im2col layout)
        # b2_ref     : (C2, 1)          f32
        # w3_ref     : (C3, C2)         bf16  (BN3 scale folded in)
        # b3_ref     : (C3, 1)          f32
        # o_ref      : (ipb, C3, HW)    bf16
        # patches_ref: (9*C1p, HW)      f32   im2col scratch (taps on sublanes)
        ipb = x_ref.shape[0]
        c1 = w1_ref.shape[0]
        c1p = patches_ref.shape[0] // 9

        # Zero the scratch once per invocation: the padding rows
        # [t*c1p + c1, (t+1)*c1p) must stay zero; data rows are rewritten
        # for every image below.
        patches_ref[...] = jnp.zeros_like(patches_ref)

        # Border-validity masks + flat shifts, hoisted out of the tap/image
        # loops.  Lane axis is per-image, so plain flat-pixel indexing is
        # correct (no cross-image masking needed).
        pos = jax.lax.broadcasted_iota(jnp.int32, (1, hw), 1)   # flat pixel idx
        col = pos % w                                           # column in row
        shifts = []
        masks = []
        for kh in range(3):
            for kw in range(3):
                dy, dx = kh - 1, kw - 1
                shifts.append(dy * w + dx)
                conds = []
                if dy == -1:
                    conds.append(pos >= w)                 # needs row h-1 >= 0
                if dy == 1:
                    conds.append(pos < (h - 1) * w)        # needs row h+1 <= H-1
                if dx == -1:
                    conds.append(col >= 1)                 # needs col w-1 >= 0
                if dx == 1:
                    conds.append(col < w - 1)              # needs col w+1 <= W-1
                m = None
                for c in conds:
                    m = c if m is None else jnp.logical_and(m, c)
                masks.append(m)                            # None => center tap

        # Weights / biases stay VMEM-resident; load once per invocation.
        w1 = w1_ref[...]
        b1 = b1_ref[...]
        w2 = w2_ref[...]
        b2 = b2_ref[...]
        w3 = w3_ref[...]
        b3 = b3_ref[...]

        # Static unrolled loop over the images of this block.
        for b in range(ipb):
            x_bf = x_ref[b]                               # (Cin, HW) bf16
            x_f32 = x_bf.astype(jnp.float32)              # residual source

            # ---- conv1 (1x1) + bn1 + relu ----
            y1 = jnp.dot(w1, x_bf, preferred_element_type=jnp.float32)
            y1 = jnp.maximum(y1 + b1, 0.0)                # (C1, HW) f32

            # ---- conv2 (3x3, pad=1, stride=1): single im2col matmul ----
            # Stack the 9 shifted + masked taps along the sublane axis of the
            # scratch (rows [t*c1p, t*c1p + c1)); tile-aligned stores since
            # c1p % 8 == 0.  Zero-padding at image borders = masked taps.
            for t in range(9):
                shift = shifts[t]
                tap = y1 if shift == 0 else pltpu.roll(y1, (-shift) % hw, axis=1)
                if masks[t] is not None:
                    tap = jnp.where(masks[t], tap, 0.0)
                patches_ref[pl.ds(t * c1p, c1), :] = tap
            patches = patches_ref[...].astype(jnp.bfloat16)       # (9*C1p, HW)
            y2 = jnp.dot(w2, patches, preferred_element_type=jnp.float32)
            y2 = jnp.maximum(y2 + b2, 0.0)                # (C2, HW) f32

            # ---- conv3 (1x1) + bn3 + residual + relu ----
            y3 = jnp.dot(w3, y2.astype(jnp.bfloat16),
                         preferred_element_type=jnp.float32)
            y3 = y3 + b3 + x_f32                          # identity residual
            o_ref[b] = jnp.maximum(y3, 0.0).astype(o_ref.dtype)

    return kernel


# ------------------------------ JAX wrapper ---------------------------------

def fold_bn(gamma, beta, mean, var):
    scale = gamma / jnp.sqrt(var + EPS)
    bias = beta - mean * scale
    return scale, bias


def _grid_steps(n):
    """1 fat step on single-TC chips; 2 'parallel' steps on dual-TC v7x."""
    steps = 1
    try:
        if "v7" in jax.devices()[0].device_kind.lower():
            steps = 2
    except Exception:
        pass
    if steps > n or n % steps != 0:
        steps = 1
    return steps


def bottleneck_forward(x_nchw, p, stride=1):
    n, cin, h, w = x_nchw.shape
    c1 = p["w1"].shape[0]      # planes
    c2 = p["w2"].shape[0]      # planes
    c3 = p["w3"].shape[0]      # planes * expansion
    hw = h * w

    # downsample is None in this config => identity residual (stride==1, cin==4*planes).
    assert stride == 1 and cin == c3, "identity residual requires stride==1 and cin==4*planes"
    assert hw % 128 == 0, "per-image pixel count must be a multiple of 128 lanes"

    # ---- fold eval-mode BN: scale into weights, bias kept as per-channel column ----
    s1, b1 = fold_bn(p["g1"], p["be1"], p["m1"], p["v1"])
    s2, b2 = fold_bn(p["g2"], p["be2"], p["m2"], p["v2"])
    s3, b3 = fold_bn(p["g3"], p["be3"], p["m3"], p["v3"])

    c1p = ((c1 + 7) // 8) * 8                                            # sublane-pad taps
    w1_eff = (p["w1"][:, :, 0, 0] * s1[:, None]).astype(jnp.bfloat16)    # (C1, Cin)
    w2_khkw = jnp.transpose(p["w2"] * s2[:, None, None, None],
                            (0, 2, 3, 1))                                # (C2, 3, 3, C1)
    w2_col = (jnp.zeros((c2, 9, c1p), jnp.float32)
              .at[:, :, :c1].set(w2_khkw.reshape(c2, 9, c1))
              .reshape(c2, 9 * c1p).astype(jnp.bfloat16))                # (C2, 9*C1p)
    w3_eff = (p["w3"][:, :, 0, 0] * s3[:, None]).astype(jnp.bfloat16)    # (C3, C2)
    b1c = b1.reshape(c1, 1).astype(jnp.float32)
    b2c = b2.reshape(c2, 1).astype(jnp.float32)
    b3c = b3.reshape(c3, 1).astype(jnp.float32)

    # No transpose: NCHW viewed as (N, C, HW) is already channels-on-sublane /
    # pixels-on-lane per image.  bf16 at the kernel boundary (f32 math inside).
    x_blk = x_nchw.reshape(n, cin, hw).astype(jnp.bfloat16)

    grid_steps = _grid_steps(n)
    ipb = n // grid_steps                                 # images per grid step

    out = pl.pallas_call(
        _make_bottleneck_kernel(h, w),
        out_shape=jax.ShapeDtypeStruct((n, c3, hw), jnp.bfloat16),
        grid=(grid_steps,),
        in_specs=[
            pl.BlockSpec((ipb, cin, hw), lambda i: (i, 0, 0)),   # activations
            pl.BlockSpec((c1, cin), lambda i: (0, 0)),           # weights: constant
            pl.BlockSpec((c1, 1), lambda i: (0, 0)),             #   index maps ->
            pl.BlockSpec((c2, 9 * c1p), lambda i: (0, 0)),       #   VMEM-resident
            pl.BlockSpec((c2, 1), lambda i: (0, 0)),
            pl.BlockSpec((c3, c2), lambda i: (0, 0)),
            pl.BlockSpec((c3, 1), lambda i: (0, 0)),
        ],
        out_specs=pl.BlockSpec((ipb, c3, hw), lambda i: (i, 0, 0)),
        scratch_shapes=[pltpu.VMEM((9 * c1p, hw), jnp.float32)],  # im2col patches
        compiler_params=pltpu.CompilerParams(
            dimension_semantics=("parallel",)),           # batch axis -> both TCs on v7x
    )(x_blk, w1_eff, b1c, w2_col, b2c, w3_eff, b3c)

    return out.reshape(n, c3, h, w)                       # free reshape; NCHW (bf16)


# --------------------------- pure-JAX reference ------------------------------

def reference_forward(x_nchw, p, stride=1):
    dn = ("NHWC", "HWIO", "NHWC")
    x = jnp.transpose(x_nchw, (0, 2, 3, 1)).astype(jnp.float32)

    def bn(y, g, be, m, v):
        return g * (y - m) / jnp.sqrt(v + EPS) + be

    w1 = jnp.transpose(p["w1"], (2, 3, 1, 0))
    w2 = jnp.transpose(p["w2"], (2, 3, 1, 0))
    w3 = jnp.transpose(p["w3"], (2, 3, 1, 0))

    y = jax.lax.conv_general_dilated(x, w1, (1, 1), "VALID", dimension_numbers=dn)
    y = jax.nn.relu(bn(y, p["g1"], p["be1"], p["m1"], p["v1"]))
    y = jax.lax.conv_general_dilated(y, w2, (stride, stride), ((1, 1), (1, 1)),
                                     dimension_numbers=dn)
    y = jax.nn.relu(bn(y, p["g2"], p["be2"], p["m2"], p["v2"]))
    y = jax.lax.conv_general_dilated(y, w3, (1, 1), "VALID", dimension_numbers=dn)
    y = bn(y, p["g3"], p["be3"], p["m3"], p["v3"]) + x
    y = jax.nn.relu(y)
    return jnp.transpose(y, (0, 3, 1, 2))


# ---------------------------------- main -------------------------------------

if __name__ == "__main__":
    # Bottleneck(inplanes=16, planes=4, stride=1, downsample=None)
    # => residual add is valid since inplanes == planes * expansion (4*4=16).
    N, INPLANES, PLANES, H, W = 2, 16, 4, 16, 16
    key = jax.random.PRNGKey(0)
    keys = jax.random.split(key, 16)

    def bn_params(k, c):
        kg, kb, km, kv = jax.random.split(k, 4)
        return (0.5 + jax.random.uniform(kg, (c,)),          # gamma
                0.1 * jax.random.normal(kb, (c,)),            # beta
                0.1 * jax.random.normal(km, (c,)),             # running_mean
                0.5 + jax.random.uniform(kv, (c,)))            # running_var > 0

    g1, be1, m1, v1 = bn_params(keys[1], PLANES)
    g2, be2, m2, v2 = bn_params(keys[2], PLANES)
    g3, be3, m3, v3 = bn_params(keys[3], PLANES * 4)

    params = {
        "w1": 0.1 * jax.random.normal(keys[4], (PLANES, INPLANES, 1, 1), jnp.float32),
        "w2": 0.1 * jax.random.normal(keys[5], (PLANES, PLANES, 3, 3), jnp.float32),
        "w3": 0.1 * jax.random.normal(keys[6], (PLANES * 4, PLANES, 1, 1), jnp.float32),
        "g1": g1, "be1": be1, "m1": m1, "v1": v1,
        "g2": g2, "be2": be2, "m2": m2, "v2": v2,
        "g3": g3, "be3": be3, "m3": m3, "v3": v3,
    }

    x = jax.random.normal(keys[0], (N, INPLANES, H, W), jnp.float32)

    out = bottleneck_forward(x, params, stride=1)
    out = jax.block_until_ready(out)

    ref = jax.block_until_ready(reference_forward(x, params, stride=1))
    assert out.shape == (N, PLANES * 4, H, W), out.shape
    # bf16 activation I/O + bf16 MXU inputs (f32 accumulation) => relaxed
    # tolerance vs. the f32 reference.
    np.testing.assert_allclose(np.asarray(out).astype(np.float32), np.asarray(ref),
                               rtol=5e-2, atol=5e-2)
    print("KERNEL_OK")
</pallas_src>

<mosaic_0001>
module attributes {stable_mosaic.version = 11 : i64} {
  func.func @kernel(%arg0: i32, %arg1: memref<2x16x256xbf16, #tpu.memory_space<vmem>>, %arg2: memref<4x16xbf16, #tpu.memory_space<vmem>>, %arg3: memref<4x1xf32, #tpu.memory_space<vmem>>, %arg4: memref<4x72xbf16, #tpu.memory_space<vmem>>, %arg5: memref<4x1xf32, #tpu.memory_space<vmem>>, %arg6: memref<16x4xbf16, #tpu.memory_space<vmem>>, %arg7: memref<16x1xf32, #tpu.memory_space<vmem>>, %arg8: memref<2x16x256xbf16, #tpu.memory_space<vmem>>, %arg9: memref<72x256xf32, #tpu.memory_space<vmem>>) attributes {dimension_semantics = [#tpu.dimension_semantics<parallel>], iteration_bounds = array<i64: 1>, scalar_prefetch = 0 : i64, scratch_operands = 1 : i64, tpu.core_type = #tpu.core_type<tc>, window_params = [{transform_indices = @transform_0, window_bounds = array<i64: 2, 16, 256>}, {pipeline_mode = #tpu.pipeline_mode<synchronous>, transform_indices = @transform_1, window_bounds = array<i64: 4, 16>}, {pipeline_mode = #tpu.pipeline_mode<synchronous>, transform_indices = @transform_2, window_bounds = array<i64: 4, 1>}, {pipeline_mode = #tpu.pipeline_mode<synchronous>, transform_indices = @transform_3, window_bounds = array<i64: 4, 72>}, {pipeline_mode = #tpu.pipeline_mode<synchronous>, transform_indices = @transform_4, window_bounds = array<i64: 4, 1>}, {pipeline_mode = #tpu.pipeline_mode<synchronous>, transform_indices = @transform_5, window_bounds = array<i64: 16, 4>}, {pipeline_mode = #tpu.pipeline_mode<synchronous>, transform_indices = @transform_6, window_bounds = array<i64: 16, 1>}, {transform_indices = @transform_7, window_bounds = array<i64: 2, 16, 256>}]} {
    %cst = arith.constant 0.000000e+00 : f32
    %0 = vector.broadcast %cst : f32 to vector<72x256xf32>
    %c0 = arith.constant 0 : index
    %c0_0 = arith.constant 0 : index
    %1 = vector.load %arg9[%c0, %c0_0] : memref<72x256xf32, #tpu.memory_space<vmem>>, vector<72x256xf32>
    tpu.vector_store %arg9[%c0, %c0_0], %0 {strides = array<i32>} : memref<72x256xf32, #tpu.memory_space<vmem>>, vector<72x256xf32>,
    %2 = tpu.iota {dimensions = array<i32: 1>} : vector<1x256xi32>
    %c16_i32 = arith.constant 16 : i32
    %c0_i32 = arith.constant 0 : i32
    %3 = arith.cmpi eq, %c16_i32, %c0_i32 : i32
    %c1_i32 = arith.constant 1 : i32
    %4 = arith.select %3, %c1_i32, %c16_i32 : i32
    %5 = vector.broadcast %4 : i32 to vector<1x256xi32>
    %6 = arith.remsi %2, %5 : vector<1x256xi32>
    %c0_i32_1 = arith.constant 0 : i32
    %7 = vector.broadcast %c0_i32_1 : i32 to vector<1x256xi32>
    %8 = arith.cmpi ne, %6, %7 : vector<1x256xi32>
    %c0_i32_2 = arith.constant 0 : i32
    %9 = vector.broadcast %c0_i32_2 : i32 to vector<1x256xi32>
    %10 = arith.cmpi slt, %6, %9 : vector<1x256xi32>
    %c0_i32_3 = arith.constant 0 : i32
    %11 = arith.cmpi slt, %4, %c0_i32_3 : i32
    %12 = vector.broadcast %11 : i1 to vector<1x256xi1>
    %13 = vector.broadcast %12 : vector<1x256xi1> to vector<1x256xi1>
    %14 = arith.xori %10, %13 : vector<1x256xi1>
    %15 = arith.andi %14, %8 : vector<1x256xi1>
    %16 = vector.broadcast %4 : i32 to vector<1x256xi32>
    %17 = arith.addi %6, %16 : vector<1x256xi32>
    %18 = arith.select %15, %17, %6 : vector<1x256xi1>, vector<1x256xi32>
    %c16_i32_4 = arith.constant 16 : i32
    %19 = vector.broadcast %c16_i32_4 : i32 to vector<1x256xi32>
    %20 = arith.cmpi sge, %2, %19 : vector<1x256xi32>
    %c1_i32_5 = arith.constant 1 : i32
    %21 = vector.broadcast %c1_i32_5 : i32 to vector<1x256xi32>
    %22 = arith.cmpi sge, %18, %21 : vector<1x256xi32>
    %23 = arith.andi %20, %22 : vector<1x256xi1>
    %c16_i32_6 = arith.constant 16 : i32
    %24 = vector.broadcast %c16_i32_6 : i32 to vector<1x256xi32>
    %25 = arith.cmpi sge, %2, %24 : vector<1x256xi32>
    %c16_i32_7 = arith.constant 16 : i32
    %26 = vector.broadcast %c16_i32_7 : i32 to vector<1x256xi32>
    %27 = arith.cmpi sge, %2, %26 : vector<1x256xi32>
    %c15_i32 = arith.constant 15 : i32
    %28 = vector.broadcast %c15_i32 : i32 to vector<1x256xi32>
    %29 = arith.cmpi slt, %18, %28 : vector<1x256xi32>
    %30 = arith.andi %27, %29 : vector<1x256xi1>
    %c1_i32_8 = arith.constant 1 : i32
    %31 = vector.broadcast %c1_i32_8 : i32 to vector<1x256xi32>
    %32 = arith.cmpi sge, %18, %31 : vector<1x256xi32>
    %c15_i32_9 = arith.constant 15 : i32
    %33 = vector.broadcast %c15_i32_9 : i32 to vector<1x256xi32>
    %34 = arith.cmpi slt, %18, %33 : vector<1x256xi32>
    %c240_i32 = arith.constant 240 : i32
    %35 = vector.broadcast %c240_i32 : i32 to vector<1x256xi32>
    %36 = arith.cmpi slt, %2, %35 : vector<1x256xi32>
    %c1_i32_10 = arith.constant 1 : i32
    %37 = vector.broadcast %c1_i32_10 : i32 to vector<1x256xi32>
    %38 = arith.cmpi sge, %18, %37 : vector<1x256xi32>
    %39 = arith.andi %36, %38 : vector<1x256xi1>
    %c240_i32_11 = arith.constant 240 : i32
    %40 = vector.broadcast %c240_i32_11 : i32 to vector<1x256xi32>
    %41 = arith.cmpi slt, %2, %40 : vector<1x256xi32>
    %c240_i32_12 = arith.constant 240 : i32
    %42 = vector.broadcast %c240_i32_12 : i32 to vector<1x256xi32>
    %43 = arith.cmpi slt, %2, %42 : vector<1x256xi32>
    %c15_i32_13 = arith.constant 15 : i32
    %44 = vector.broadcast %c15_i32_13 : i32 to vector<1x256xi32>
    %45 = arith.cmpi slt, %18, %44 : vector<1x256xi32>
    %46 = arith.andi %43, %45 : vector<1x256xi1>
    %c0_14 = arith.constant 0 : index
    %c0_15 = arith.constant 0 : index
    %47 = vector.load %arg2[%c0_14, %c0_15] : memref<4x16xbf16, #tpu.memory_space<vmem>>, vector<4x16xbf16>
    %c0_16 = arith.constant 0 : index
    %c0_17 = arith.constant 0 : index
    %48 = vector.load %arg3[%c0_16, %c0_17] : memref<4x1xf32, #tpu.memory_space<vmem>>, vector<4x1xf32>
    %c0_18 = arith.constant 0 : index
    %c0_19 = arith.constant 0 : index
    %49 = vector.load %arg4[%c0_18, %c0_19] : memref<4x72xbf16, #tpu.memory_space<vmem>>, vector<4x72xbf16>
    %c0_20 = arith.constant 0 : index
    %c0_21 = arith.constant 0 : index
    %50 = vector.load %arg5[%c0_20, %c0_21] : memref<4x1xf32, #tpu.memory_space<vmem>>, vector<4x1xf32>
    %c0_22 = arith.constant 0 : index
    %c0_23 = arith.constant 0 : index
    %51 = vector.load %arg6[%c0_22, %c0_23] : memref<16x4xbf16, #tpu.memory_space<vmem>>, vector<16x4xbf16>
    %c0_24 = arith.constant 0 : index
    %c0_25 = arith.constant 0 : index
    %52 = vector.load %arg7[%c0_24, %c0_25] : memref<16x1xf32, #tpu.memory_space<vmem>>, vector<16x1xf32>
    %c0_26 = arith.constant 0 : index
    %c0_27 = arith.constant 0 : index
    %c0_28 = arith.constant 0 : index
    %53 = vector.load %arg1[%c0_26, %c0_27, %c0_28] : memref<2x16x256xbf16, #tpu.memory_space<vmem>>, vector<1x16x256xbf16>
    %54 = vector.shape_cast %53 : vector<1x16x256xbf16> to vector<16x256xbf16>
    %55 = arith.extf %54 : vector<16x256xbf16> to vector<16x256xf32>
    %cst_29 = arith.constant dense<0.000000e+00> : vector<4x256xf32>
    %56 = tpu.matmul %47, %54, %cst_29 {dimension_numbers = #tpu.dot_dimension_numbers<[1], [0], [0], [1], [0, 0, 1, 1], [], []>} : vector<4x16xbf16>, vector<16x256xbf16>, vector<4x256xf32> -> vector<4x256xf32>
    %57 = vector.broadcast %48 : vector<4x1xf32> to vector<4x256xf32>
    %58 = arith.addf %56, %57 : vector<4x256xf32>
    %cst_30 = arith.constant 0.000000e+00 : f32
    %59 = vector.broadcast %cst_30 : f32 to vector<4x256xf32>
    %60 = arith.maximumf %58, %59 : vector<4x256xf32>
    %c17_i32 = arith.constant 17 : i32
    %61 = tpu.dynamic_rotate %60 by %c17_i32 dim 1 : vector<4x256xf32>, i32 -> vector<4x256xf32>
    %cst_31 = arith.constant 0.000000e+00 : f32
    %62 = vector.shape_cast %23 : vector<1x256xi1> to vector<1x256xi1>
    %63 = vector.broadcast %62 : vector<1x256xi1> to vector<4x256xi1>
    %64 = vector.broadcast %cst_31 : f32 to vector<4x256xf32>
    %65 = arith.select %63, %61, %64 : vector<4x256xi1>, vector<4x256xf32>
    %c0_32 = arith.constant 0 : index
    %c0_33 = arith.constant 0 : index
    %66 = vector.load %arg9[%c0_32, %c0_33] : memref<72x256xf32, #tpu.memory_space<vmem>>, vector<4x256xf32>
    tpu.vector_store %arg9[%c0_32, %c0_33], %65 {strides = array<i32>} : memref<72x256xf32, #tpu.memory_space<vmem>>, vector<4x256xf32>,
    %c16_i32_34 = arith.constant 16 : i32
    %67 = tpu.dynamic_rotate %60 by %c16_i32_34 dim 1 : vector<4x256xf32>, i32 -> vector<4x256xf32>
    %cst_35 = arith.constant 0.000000e+00 : f32
    %68 = vector.shape_cast %25 : vector<1x256xi1> to vector<1x256xi1>
    %69 = vector.broadcast %68 : vector<1x256xi1> to vector<4x256xi1>
    %70 = vector.broadcast %cst_35 : f32 to vector<4x256xf32>
    %71 = arith.select %69, %67, %70 : vector<4x256xi1>, vector<4x256xf32>
    %c8 = arith.constant 8 : index
    %c0_36 = arith.constant 0 : index
    %72 = vector.load %arg9[%c8, %c0_36] : memref<72x256xf32, #tpu.memory_space<vmem>>, vector<4x256xf32>
    tpu.vector_store %arg9[%c8, %c0_36], %71 {strides = array<i32>} : memref<72x256xf32, #tpu.memory_space<vmem>>, vector<4x256xf32>,
    %c15_i32_37 = arith.constant 15 : i32
    %73 = tpu.dynamic_rotate %60 by %c15_i32_37 dim 1 : vector<4x256xf32>, i32 -> vector<4x256xf32>
    %cst_38 = arith.constant 0.000000e+00 : f32
    %74 = vector.shape_cast %30 : vector<1x256xi1> to vector<1x256xi1>
    %75 = vector.broadcast %74 : vector<1x256xi1> to vector<4x256xi1>
    %76 = vector.broadcast %cst_38 : f32 to vector<4x256xf32>
    %77 = arith.select %75, %73, %76 : vector<4x256xi1>, vector<4x256xf32>
    %c16 = arith.constant 16 : index
    %c0_39 = arith.constant 0 : index
    %78 = vector.load %arg9[%c16, %c0_39] : memref<72x256xf32, #tpu.memory_space<vmem>>, vector<4x256xf32>
    tpu.vector_store %arg9[%c16, %c0_39], %77 {strides = array<i32>} : memref<72x256xf32, #tpu.memory_space<vmem>>, vector<4x256xf32>,
    %c1_i32_40 = arith.constant 1 : i32
    %79 = tpu.dynamic_rotate %60 by %c1_i32_40 dim 1 : vector<4x256xf32>, i32 -> vector<4x256xf32>
    %cst_41 = arith.constant 0.000000e+00 : f32
    %80 = vector.shape_cast %32 : vector<1x256xi1> to vector<1x256xi1>
    %81 = vector.broadcast %80 : vector<1x256xi1> to vector<4x256xi1>
    %82 = vector.broadcast %cst_41 : f32 to vector<4x256xf32>
    %83 = arith.select %81, %79, %82 : vector<4x256xi1>, vector<4x256xf32>
    %c24 = arith.constant 24 : index
    %c0_42 = arith.constant 0 : index
    %84 = vector.load %arg9[%c24, %c0_42] : memref<72x256xf32, #tpu.memory_space<vmem>>, vector<4x256xf32>
    tpu.vector_store %arg9[%c24, %c0_42], %83 {strides = array<i32>} : memref<72x256xf32, #tpu.memory_space<vmem>>, vector<4x256xf32>,
    %c32 = arith.constant 32 : index
    %c0_43 = arith.constant 0 : index
    %85 = vector.load %arg9[%c32, %c0_43] : memref<72x256xf32, #tpu.memory_space<vmem>>, vector<4x256xf32>
    tpu.vector_store %arg9[%c32, %c0_43], %60 {strides = array<i32>} : memref<72x256xf32, #tpu.memory_space<vmem>>, vector<4x256xf32>,
    %c255_i32 = arith.constant 255 : i32
    %86 = tpu.dynamic_rotate %60 by %c255_i32 dim 1 : vector<4x256xf32>, i32 -> vector<4x256xf32>
    %cst_44 = arith.constant 0.000000e+00 : f32
    %87 = vector.shape_cast %34 : vector<1x256xi1> to vector<1x256xi1>
    %88 = vector.broadcast %87 : vector<1x256xi1> to vector<4x256xi1>
    %89 = vector.broadcast %cst_44 : f32 to vector<4x256xf32>
    %90 = arith.select %88, %86, %89 : vector<4x256xi1>, vector<4x256xf32>
    %c40 = arith.constant 40 : index
    %c0_45 = arith.constant 0 : index
    %91 = vector.load %arg9[%c40, %c0_45] : memref<72x256xf32, #tpu.memory_space<vmem>>, vector<4x256xf32>
    tpu.vector_store %arg9[%c40, %c0_45], %90 {strides = array<i32>} : memref<72x256xf32, #tpu.memory_space<vmem>>, vector<4x256xf32>,
    %c241_i32 = arith.constant 241 : i32
    %92 = tpu.dynamic_rotate %60 by %c241_i32 dim 1 : vector<4x256xf32>, i32 -> vector<4x256xf32>
    %cst_46 = arith.constant 0.000000e+00 : f32
    %93 = vector.shape_cast %39 : vector<1x256xi1> to vector<1x256xi1>
    %94 = vector.broadcast %93 : vector<1x256xi1> to vector<4x256xi1>
    %95 = vector.broadcast %cst_46 : f32 to vector<4x256xf32>
    %96 = arith.select %94, %92, %95 : vector<4x256xi1>, vector<4x256xf32>
    %c48 = arith.constant 48 : index
    %c0_47 = arith.constant 0 : index
    %97 = vector.load %arg9[%c48, %c0_47] : memref<72x256xf32, #tpu.memory_space<vmem>>, vector<4x256xf32>
    tpu.vector_store %arg9[%c48, %c0_47], %96 {strides = array<i32>} : memref<72x256xf32, #tpu.memory_space<vmem>>, vector<4x256xf32>,
    %c240_i32_48 = arith.constant 240 : i32
    %98 = tpu.dynamic_rotate %60 by %c240_i32_48 dim 1 : vector<4x256xf32>, i32 -> vector<4x256xf32>
    %cst_49 = arith.constant 0.000000e+00 : f32
    %99 = vector.shape_cast %41 : vector<1x256xi1> to vector<1x256xi1>
    %100 = vector.broadcast %99 : vector<1x256xi1> to vector<4x256xi1>
    %101 = vector.broadcast %cst_49 : f32 to vector<4x256xf32>
    %102 = arith.select %100, %98, %101 : vector<4x256xi1>, vector<4x256xf32>
    %c56 = arith.constant 56 : index
    %c0_50 = arith.constant 0 : index
    %103 = vector.load %arg9[%c56, %c0_50] : memref<72x256xf32, #tpu.memory_space<vmem>>, vector<4x256xf32>
    tpu.vector_store %arg9[%c56, %c0_50], %102 {strides = array<i32>} : memref<72x256xf32, #tpu.memory_space<vmem>>, vector<4x256xf32>,
    %c239_i32 = arith.constant 239 : i32
    %104 = tpu.dynamic_rotate %60 by %c239_i32 dim 1 : vector<4x256xf32>, i32 -> vector<4x256xf32>
    %cst_51 = arith.constant 0.000000e+00 : f32
    %105 = vector.shape_cast %46 : vector<1x256xi1> to vector<1x256xi1>
    %106 = vector.broadcast %105 : vector<1x256xi1> to vector<4x256xi1>
    %107 = vector.broadcast %cst_51 : f32 to vector<4x256xf32>
    %108 = arith.select %106, %104, %107 : vector<4x256xi1>, vector<4x256xf32>
    %c64 = arith.constant 64 : index
    %c0_52 = arith.constant 0 : index
    %109 = vector.load %arg9[%c64, %c0_52] : memref<72x256xf32, #tpu.memory_space<vmem>>, vector<4x256xf32>
    tpu.vector_store %arg9[%c64, %c0_52], %108 {strides = array<i32>} : memref<72x256xf32, #tpu.memory_space<vmem>>, vector<4x256xf32>,
    %c0_53 = arith.constant 0 : index
    %c0_54 = arith.constant 0 : index
    %110 = vector.load %arg9[%c0_53, %c0_54] : memref<72x256xf32, #tpu.memory_space<vmem>>, vector<72x256xf32>
    %111 = arith.truncf %110 : vector<72x256xf32> to vector<72x256xbf16>
    %cst_55 = arith.constant dense<0.000000e+00> : vector<4x256xf32>
    %112 = tpu.matmul %49, %111, %cst_55 {dimension_numbers = #tpu.dot_dimension_numbers<[1], [0], [0], [1], [0, 0, 1, 1], [], []>} : vector<4x72xbf16>, vector<72x256xbf16>, vector<4x256xf32> -> vector<4x256xf32>
    %113 = vector.broadcast %50 : vector<4x1xf32> to vector<4x256xf32>
    %114 = arith.addf %112, %113 : vector<4x256xf32>
    %cst_56 = arith.constant 0.000000e+00 : f32
    %115 = vector.broadcast %cst_56 : f32 to vector<4x256xf32>
    %116 = arith.maximumf %114, %115 : vector<4x256xf32>
    %117 = arith.truncf %116 : vector<4x256xf32> to vector<4x256xbf16>
    %cst_57 = arith.constant dense<0.000000e+00> : vector<16x256xf32>
    %118 = tpu.matmul %51, %117, %cst_57 {dimension_numbers = #tpu.dot_dimension_numbers<[1], [0], [0], [1], [0, 0, 1, 1], [], []>} : vector<16x4xbf16>, vector<4x256xbf16>, vector<16x256xf32> -> vector<16x256xf32>
    %119 = vector.broadcast %52 : vector<16x1xf32> to vector<16x256xf32>
    %120 = arith.addf %118, %119 : vector<16x256xf32>
    %121 = arith.addf %120, %55 : vector<16x256xf32>
    %cst_58 = arith.constant 0.000000e+00 : f32
    %122 = vector.broadcast %cst_58 : f32 to vector<16x256xf32>
    %123 = arith.maximumf %121, %122 : vector<16x256xf32>
    %124 = arith.truncf %123 : vector<16x256xf32> to vector<16x256xbf16>
    %c0_59 = arith.constant 0 : index
    %c0_60 = arith.constant 0 : index
    %c0_61 = arith.constant 0 : index
    %125 = vector.load %arg8[%c0_59, %c0_60, %c0_61] : memref<2x16x256xbf16, #tpu.memory_space<vmem>>, vector<1x16x256xbf16>
    %126 = vector.shape_cast %125 : vector<1x16x256xbf16> to vector<16x256xbf16>
    %127 = vector.shape_cast %124 : vector<16x256xbf16> to vector<1x16x256xbf16>
    tpu.vector_store %arg8[%c0_59, %c0_60, %c0_61], %127 {strides = array<i32>} : memref<2x16x256xbf16, #tpu.memory_space<vmem>>, vector<1x16x256xbf16>,
    %c1 = arith.constant 1 : index
    %c0_62 = arith.constant 0 : index
    %c0_63 = arith.constant 0 : index
    %128 = vector.load %arg1[%c1, %c0_62, %c0_63] : memref<2x16x256xbf16, #tpu.memory_space<vmem>>, vector<1x16x256xbf16>
    %129 = vector.shape_cast %128 : vector<1x16x256xbf16> to vector<16x256xbf16>
    %130 = arith.extf %129 : vector<16x256xbf16> to vector<16x256xf32>
    %cst_64 = arith.constant dense<0.000000e+00> : vector<4x256xf32>
    %131 = tpu.matmul %47, %129, %cst_64 {dimension_numbers = #tpu.dot_dimension_numbers<[1], [0], [0], [1], [0, 0, 1, 1], [], []>} : vector<4x16xbf16>, vector<16x256xbf16>, vector<4x256xf32> -> vector<4x256xf32>
    %132 = vector.broadcast %48 : vector<4x1xf32> to vector<4x256xf32>
    %133 = arith.addf %131, %132 : vector<4x256xf32>
    %cst_65 = arith.constant 0.000000e+00 : f32
    %134 = vector.broadcast %cst_65 : f32 to vector<4x256xf32>
    %135 = arith.maximumf %133, %134 : vector<4x256xf32>
    %c17_i32_66 = arith.constant 17 : i32
    %136 = tpu.dynamic_rotate %135 by %c17_i32_66 dim 1 : vector<4x256xf32>, i32 -> vector<4x256xf32>
    %cst_67 = arith.constant 0.000000e+00 : f32
    %137 = vector.shape_cast %23 : vector<1x256xi1> to vector<1x256xi1>
    %138 = vector.broadcast %137 : vector<1x256xi1> to vector<4x256xi1>
    %139 = vector.broadcast %cst_67 : f32 to vector<4x256xf32>
    %140 = arith.select %138, %136, %139 : vector<4x256xi1>, vector<4x256xf32>
    %c0_68 = arith.constant 0 : index
    %c0_69 = arith.constant 0 : index
    %141 = vector.load %arg9[%c0_68, %c0_69] : memref<72x256xf32, #tpu.memory_space<vmem>>, vector<4x256xf32>
    tpu.vector_store %arg9[%c0_68, %c0_69], %140 {strides = array<i32>} : memref<72x256xf32, #tpu.memory_space<vmem>>, vector<4x256xf32>,
    %c16_i32_70 = arith.constant 16 : i32
    %142 = tpu.dynamic_rotate %135 by %c16_i32_70 dim 1 : vector<4x256xf32>, i32 -> vector<4x256xf32>
    %cst_71 = arith.constant 0.000000e+00 : f32
    %143 = vector.shape_cast %25 : vector<1x256xi1> to vector<1x256xi1>
    %144 = vector.broadcast %143 : vector<1x256xi1> to vector<4x256xi1>
    %145 = vector.broadcast %cst_71 : f32 to vector<4x256xf32>
    %146 = arith.select %144, %142, %145 : vector<4x256xi1>, vector<4x256xf32>
    %c8_72 = arith.constant 8 : index
    %c0_73 = arith.constant 0 : index
    %147 = vector.load %arg9[%c8_72, %c0_73] : memref<72x256xf32, #tpu.memory_space<vmem>>, vector<4x256xf32>
    tpu.vector_store %arg9[%c8_72, %c0_73], %146 {strides = array<i32>} : memref<72x256xf32, #tpu.memory_space<vmem>>, vector<4x256xf32>,
    %c15_i32_74 = arith.constant 15 : i32
    %148 = tpu.dynamic_rotate %135 by %c15_i32_74 dim 1 : vector<4x256xf32>, i32 -> vector<4x256xf32>
    %cst_75 = arith.constant 0.000000e+00 : f32
    %149 = vector.shape_cast %30 : vector<1x256xi1> to vector<1x256xi1>
    %150 = vector.broadcast %149 : vector<1x256xi1> to vector<4x256xi1>
    %151 = vector.broadcast %cst_75 : f32 to vector<4x256xf32>
    %152 = arith.select %150, %148, %151 : vector<4x256xi1>, vector<4x256xf32>
    %c16_76 = arith.constant 16 : index
    %c0_77 = arith.constant 0 : index
    %153 = vector.load %arg9[%c16_76, %c0_77] : memref<72x256xf32, #tpu.memory_space<vmem>>, vector<4x256xf32>
    tpu.vector_store %arg9[%c16_76, %c0_77], %152 {strides = array<i32>} : memref<72x256xf32, #tpu.memory_space<vmem>>, vector<4x256xf32>,
    %c1_i32_78 = arith.constant 1 : i32
    %154 = tpu.dynamic_rotate %135 by %c1_i32_78 dim 1 : vector<4x256xf32>, i32 -> vector<4x256xf32>
    %cst_79 = arith.constant 0.000000e+00 : f32
    %155 = vector.shape_cast %32 : vector<1x256xi1> to vector<1x256xi1>
    %156 = vector.broadcast %155 : vector<1x256xi1> to vector<4x256xi1>
    %157 = vector.broadcast %cst_79 : f32 to vector<4x256xf32>
    %158 = arith.select %156, %154, %157 : vector<4x256xi1>, vector<4x256xf32>
    %c24_80 = arith.constant 24 : index
    %c0_81 = arith.constant 0 : index
    %159 = vector.load %arg9[%c24_80, %c0_81] : memref<72x256xf32, #tpu.memory_space<vmem>>, vector<4x256xf32>
    tpu.vector_store %arg9[%c24_80, %c0_81], %158 {strides = array<i32>} : memref<72x256xf32, #tpu.memory_space<vmem>>, vector<4x256xf32>,
    %c32_82 = arith.constant 32 : index
    %c0_83 = arith.constant 0 : index
    %160 = vector.load %arg9[%c32_82, %c0_83] : memref<72x256xf32, #tpu.memory_space<vmem>>, vector<4x256xf32>
    tpu.vector_store %arg9[%c32_82, %c0_83], %135 {strides = array<i32>} : memref<72x256xf32, #tpu.memory_space<vmem>>, vector<4x256xf32>,
    %c255_i32_84 = arith.constant 255 : i32
    %161 = tpu.dynamic_rotate %135 by %c255_i32_84 dim 1 : vector<4x256xf32>, i32 -> vector<4x256xf32>
    %cst_85 = arith.constant 0.000000e+00 : f32
    %162 = vector.shape_cast %34 : vector<1x256xi1> to vector<1x256xi1>
    %163 = vector.broadcast %162 : vector<1x256xi1> to vector<4x256xi1>
    %164 = vector.broadcast %cst_85 : f32 to vector<4x256xf32>
    %165 = arith.select %163, %161, %164 : vector<4x256xi1>, vector<4x256xf32>
    %c40_86 = arith.constant 40 : index
    %c0_87 = arith.constant 0 : index
    %166 = vector.load %arg9[%c40_86, %c0_87] : memref<72x256xf32, #tpu.memory_space<vmem>>, vector<4x256xf32>
    tpu.vector_store %arg9[%c40_86, %c0_87], %165 {strides = array<i32>} : memref<72x256xf32, #tpu.memory_space<vmem>>, vector<4x256xf32>,
    %c241_i32_88 = arith.constant 241 : i32
    %167 = tpu.dynamic_rotate %135 by %c241_i32_88 dim 1 : vector<4x256xf32>, i32 -> vector<4x256xf32>
    %cst_89 = arith.constant 0.000000e+00 : f32
    %168 = vector.shape_cast %39 : vector<1x256xi1> to vector<1x256xi1>
    %169 = vector.broadcast %168 : vector<1x256xi1> to vector<4x256xi1>
    %170 = vector.broadcast %cst_89 : f32 to vector<4x256xf32>
    %171 = arith.select %169, %167, %170 : vector<4x256xi1>, vector<4x256xf32>
    %c48_90 = arith.constant 48 : index
    %c0_91 = arith.constant 0 : index
    %172 = vector.load %arg9[%c48_90, %c0_91] : memref<72x256xf32, #tpu.memory_space<vmem>>, vector<4x256xf32>
    tpu.vector_store %arg9[%c48_90, %c0_91], %171 {strides = array<i32>} : memref<72x256xf32, #tpu.memory_space<vmem>>, vector<4x256xf32>,
    %c240_i32_92 = arith.constant 240 : i32
    %173 = tpu.dynamic_rotate %135 by %c240_i32_92 dim 1 : vector<4x256xf32>, i32 -> vector<4x256xf32>
    %cst_93 = arith.constant 0.000000e+00 : f32
    %174 = vector.shape_cast %41 : vector<1x256xi1> to vector<1x256xi1>
    %175 = vector.broadcast %174 : vector<1x256xi1> to vector<4x256xi1>
    %176 = vector.broadcast %cst_93 : f32 to vector<4x256xf32>
    %177 = arith.select %175, %173, %176 : vector<4x256xi1>, vector<4x256xf32>
    %c56_94 = arith.constant 56 : index
    %c0_95 = arith.constant 0 : index
    %178 = vector.load %arg9[%c56_94, %c0_95] : memref<72x256xf32, #tpu.memory_space<vmem>>, vector<4x256xf32>
    tpu.vector_store %arg9[%c56_94, %c0_95], %177 {strides = array<i32>} : memref<72x256xf32, #tpu.memory_space<vmem>>, vector<4x256xf32>,
    %c239_i32_96 = arith.constant 239 : i32
    %179 = tpu.dynamic_rotate %135 by %c239_i32_96 dim 1 : vector<4x256xf32>, i32 -> vector<4x256xf32>
    %cst_97 = arith.constant 0.000000e+00 : f32
    %180 = vector.shape_cast %46 : vector<1x256xi1> to vector<1x256xi1>
    %181 = vector.broadcast %180 : vector<1x256xi1> to vector<4x256xi1>
    %182 = vector.broadcast %cst_97 : f32 to vector<4x256xf32>
    %183 = arith.select %181, %179, %182 : vector<4x256xi1>, vector<4x256xf32>
    %c64_98 = arith.constant 64 : index
    %c0_99 = arith.constant 0 : index
    %184 = vector.load %arg9[%c64_98, %c0_99] : memref<72x256xf32, #tpu.memory_space<vmem>>, vector<4x256xf32>
    tpu.vector_store %arg9[%c64_98, %c0_99], %183 {strides = array<i32>} : memref<72x256xf32, #tpu.memory_space<vmem>>, vector<4x256xf32>,
    %c0_100 = arith.constant 0 : index
    %c0_101 = arith.constant 0 : index
    %185 = vector.load %arg9[%c0_100, %c0_101] : memref<72x256xf32, #tpu.memory_space<vmem>>, vector<72x256xf32>
    %186 = arith.truncf %185 : vector<72x256xf32> to vector<72x256xbf16>
    %cst_102 = arith.constant dense<0.000000e+00> : vector<4x256xf32>
    %187 = tpu.matmul %49, %186, %cst_102 {dimension_numbers = #tpu.dot_dimension_numbers<[1], [0], [0], [1], [0, 0, 1, 1], [], []>} : vector<4x72xbf16>, vector<72x256xbf16>, vector<4x256xf32> -> vector<4x256xf32>
    %188 = vector.broadcast %50 : vector<4x1xf32> to vector<4x256xf32>
    %189 = arith.addf %187, %188 : vector<4x256xf32>
    %cst_103 = arith.constant 0.000000e+00 : f32
    %190 = vector.broadcast %cst_103 : f32 to vector<4x256xf32>
    %191 = arith.maximumf %189, %190 : vector<4x256xf32>
    %192 = arith.truncf %191 : vector<4x256xf32> to vector<4x256xbf16>
    %cst_104 = arith.constant dense<0.000000e+00> : vector<16x256xf32>
    %193 = tpu.matmul %51, %192, %cst_104 {dimension_numbers = #tpu.dot_dimension_numbers<[1], [0], [0], [1], [0, 0, 1, 1], [], []>} : vector<16x4xbf16>, vector<4x256xbf16>, vector<16x256xf32> -> vector<16x256xf32>
    %194 = vector.broadcast %52 : vector<16x1xf32> to vector<16x256xf32>
    %195 = arith.addf %193, %194 : vector<16x256xf32>
    %196 = arith.addf %195, %130 : vector<16x256xf32>
    %cst_105 = arith.constant 0.000000e+00 : f32
    %197 = vector.broadcast %cst_105 : f32 to vector<16x256xf32>
    %198 = arith.maximumf %196, %197 : vector<16x256xf32>
    %199 = arith.truncf %198 : vector<16x256xf32> to vector<16x256xbf16>
    %c1_106 = arith.constant 1 : index
    %c0_107 = arith.constant 0 : index
    %c0_108 = arith.constant 0 : index
    %200 = vector.load %arg8[%c1_106, %c0_107, %c0_108] : memref<2x16x256xbf16, #tpu.memory_space<vmem>>, vector<1x16x256xbf16>
    %201 = vector.shape_cast %200 : vector<1x16x256xbf16> to vector<16x256xbf16>
    %202 = vector.shape_cast %199 : vector<16x256xbf16> to vector<1x16x256xbf16>
    tpu.vector_store %arg8[%c1_106, %c0_107, %c0_108], %202 {strides = array<i32>} : memref<2x16x256xbf16, #tpu.memory_space<vmem>>, vector<1x16x256xbf16>,
    return
  }
  func.func @transform_0(%arg0: i32) -> (i32, i32, i32) {
    %c0_i32 = arith.constant 0 : i32
    %c0_i32_0 = arith.constant 0 : i32
    %c0_i32_1 = arith.constant 0 : i32
    return %arg0, %c0_i32, %c0_i32_0 : i32, i32, i32
  }
  func.func @transform_1(%arg0: i32) -> (i32, i32) {
    %c0_i32 = arith.constant 0 : i32
    %c0_i32_0 = arith.constant 0 : i32
    %c0_i32_1 = arith.constant 0 : i32
    return %c0_i32, %c0_i32_0 : i32, i32
  }
  func.func @transform_2(%arg0: i32) -> (i32, i32) {
    %c0_i32 = arith.constant 0 : i32
    %c0_i32_0 = arith.constant 0 : i32
    %c0_i32_1 = arith.constant 0 : i32
    return %c0_i32, %c0_i32_0 : i32, i32
  }
  func.func @transform_3(%arg0: i32) -> (i32, i32) {
    %c0_i32 = arith.constant 0 : i32
    %c0_i32_0 = arith.constant 0 : i32
    %c0_i32_1 = arith.constant 0 : i32
    return %c0_i32, %c0_i32_0 : i32, i32
  }
  func.func @transform_4(%arg0: i32) -> (i32, i32) {
    %c0_i32 = arith.constant 0 : i32
    %c0_i32_0 = arith.constant 0 : i32
    %c0_i32_1 = arith.constant 0 : i32
    return %c0_i32, %c0_i32_0 : i32, i32
  }
  func.func @transform_5(%arg0: i32) -> (i32, i32) {
    %c0_i32 = arith.constant 0 : i32
    %c0_i32_0 = arith.constant 0 : i32
    %c0_i32_1 = arith.constant 0 : i32
    return %c0_i32, %c0_i32_0 : i32, i32
  }
  func.func @transform_6(%arg0: i32) -> (i32, i32) {
    %c0_i32 = arith.constant 0 : i32
    %c0_i32_0 = arith.constant 0 : i32
    %c0_i32_1 = arith.constant 0 : i32
    return %c0_i32, %c0_i32_0 : i32, i32
  }
  func.func @transform_7(%arg0: i32) -> (i32, i32, i32) {
    %c0_i32 = arith.constant 0 : i32
    %c0_i32_0 = arith.constant 0 : i32
    %c0_i32_1 = arith.constant 0 : i32
    return %arg0, %c0_i32, %c0_i32_0 : i32, i32, i32
  }
}

</mosaic_0001>

<llo_original>
// kernel: tpu_custom_call.1
$region0: #{tpu_custom_call.1}
  #allocation0 [shape = 'u32[]', space=smem, size = 0x4, offset = 0x4, fixed_abs, tag = 'smem constant byte address 0x4 - core index']
  #allocation1 [shape = 'u32[144,128]{1,0:T(1,128)}', space=vmem, size = 0x12000, scoped, tag = 'internal scratch']
  #allocation2 [shape = 'f32[72,256]{1,0:T(8,128)}', space=vmem, size = 0x12000, scoped, tag = 'scratch operand']
  %s0 = inlined_call_operand.vmem [shape: bf16[2,16,256], index: 0, kind: input, shape index: {}]
  %s1 = inlined_call_operand.vmem [shape: bf16[4,16], index: 1, kind: input, shape index: {}]
  %s2 = inlined_call_operand.vmem [shape: f32[4,1], index: 2, kind: input, shape index: {}]
  %s3 = inlined_call_operand.vmem [shape: bf16[4,72], index: 3, kind: input, shape index: {}]
  %s4 = inlined_call_operand.vmem [shape: f32[4,1], index: 4, kind: input, shape index: {}]
  %s5 = inlined_call_operand.vmem [shape: bf16[16,4], index: 5, kind: input, shape index: {}]
  %s6 = inlined_call_operand.vmem [shape: f32[16,1], index: 6, kind: input, shape index: {}]
  %s7 = inlined_call_operand.hbm [shape: bf16[2,16,256], index: 7, kind: output, shape index: {}]
  %s8 = sld [smem:[#allocation0]]
  $region38: #{tpu_custom_call.1} parent=0
    _
  %s10 = ssub.s32 1, %s8
  %s11 = scalar_select 0, %s10, %s8
  $region1: #{tpu_custom_call.1} parent=0
    #allocation3 [shape = 'u8[16384]{0}', space=vmem, size = 0x4000, scoped, tag = 'output window, operand 0, single buffered']
    #allocation4 [shape = 's32[1]{0}', space=sflag, size = 0x4, scoped, tag = 'scoped memory for tpu_custom_call.1']
    %12 = vsyncpa [#allocation4], 0
    // Predicated region
    $region2: #{tpu_custom_call.1} parent=1 // pred_check
      _
    $region3: #{tpu_custom_call.1} parent=1 // pred_check_branch
      %14 = sbr.rel (0) target = $region5
    $region4: #{tpu_custom_call.1} parent=1 // pred_region
      _
    $region5: #{tpu_custom_call.1} parent=1 // pred_fallthru
      _
    // Predicated region
    $region6: #{tpu_custom_call.1} parent=1 // pred_check
      _
    $region7: #{tpu_custom_call.1} parent=1 // pred_check_branch
      %16 = sbr.rel (0) target = $region9
    $region8: #{tpu_custom_call.1} parent=1 // pred_region
      _
    $region9: #{tpu_custom_call.1} parent=1 // pred_fallthru
      _
    // Predicated region
    $region10: #{tpu_custom_call.1} parent=1 // pred_check
      _
    $region11: #{tpu_custom_call.1} parent=1 // pred_check_branch
      %18 = sbr.rel (0) target = $region13
    $region12: #{tpu_custom_call.1} parent=1 // pred_region
      _
    $region13: #{tpu_custom_call.1} parent=1 // pred_fallthru
      _
    // Predicated region
    $region14: #{tpu_custom_call.1} parent=1 // pred_check
      _
    $region15: #{tpu_custom_call.1} parent=1 // pred_check_branch
      %20 = sbr.rel (0) target = $region17
    $region16: #{tpu_custom_call.1} parent=1 // pred_region
      _
    $region17: #{tpu_custom_call.1} parent=1 // pred_fallthru
      _
    // Predicated region
    $region18: #{tpu_custom_call.1} parent=1 // pred_check
      _
    $region19: #{tpu_custom_call.1} parent=1 // pred_check_branch
      %22 = sbr.rel (0) target = $region21
    $region20: #{tpu_custom_call.1} parent=1 // pred_region
      _
    $region21: #{tpu_custom_call.1} parent=1 // pred_fallthru
      _
    // Predicated region
    $region22: #{tpu_custom_call.1} parent=1 // pred_check
      _
    $region23: #{tpu_custom_call.1} parent=1 // pred_check_branch
      %24 = sbr.rel (0) target = $region25
    $region24: #{tpu_custom_call.1} parent=1 // pred_region
      _
    $region25: #{tpu_custom_call.1} parent=1 // pred_fallthru
      _
    // Predicated region
    $region26: #{tpu_custom_call.1} parent=1 // pred_check
      _
    $region27: #{tpu_custom_call.1} parent=1 // pred_check_branch
      %26 = sbr.rel (0) target = $region29
    $region28: #{tpu_custom_call.1} parent=1 // pred_region
      _
    $region29: #{tpu_custom_call.1} parent=1 // pred_fallthru
      _
    %28 = vst [vmem:[#allocation2] sm:$0xff] 0.0
    %29 = vst [vmem:[#allocation2 + $0x8] sm:$0xff] 0.0
    %30 = vst [vmem:[#allocation2 + $0x10] sm:$0xff] 0.0
    %31 = vst [vmem:[#allocation2 + $0x18] sm:$0xff] 0.0
    %32 = vst [vmem:[#allocation2 + $0x20] sm:$0xff] 0.0
    %33 = vst [vmem:[#allocation2 + $0x28] sm:$0xff] 0.0
    %34 = vst [vmem:[#allocation2 + $0x30] sm:$0xff] 0.0
    %35 = vst [vmem:[#allocation2 + $0x38] sm:$0xff] 0.0
    %36 = vst [vmem:[#allocation2 + $0x40] sm:$0xff] 0.0
    %37 = vst [vmem:[#allocation2 + $0x48] sm:$0xff] 0.0
    %38 = vst [vmem:[#allocation2 + $0x50] sm:$0xff] 0.0
    %39 = vst [vmem:[#allocation2 + $0x58] sm:$0xff] 0.0
    %40 = vst [vmem:[#allocation2 + $0x60] sm:$0xff] 0.0
    %41 = vst [vmem:[#allocation2 + $0x68] sm:$0xff] 0.0
    %42 = vst [vmem:[#allocation2 + $0x70] sm:$0xff] 0.0
    %43 = vst [vmem:[#allocation2 + $0x78] sm:$0xff] 0.0
    %44 = vst [vmem:[#allocation2 + $0x80] sm:$0xff] 0.0
    %45 = vst [vmem:[#allocation2 + $0x88] sm:$0xff] 0.0
    %v46 = vlaneseq
    %v47 = vand.u32 %v46, 127
    %v48 = vadd.s32 %v47, 128
    %vm49 = vcmp.lt.s32.totalorder %v47, 0
    %v50 = vsub.s32 0, %v47
    %v51 = vsel %vm49, %v50, %v47
    %v52 = vshrl.u32 %v51, 4
    %v53 = vand.u32 %v51, 15
    %v54 = vsub.s32 0, %v53
    %v55 = vsel %vm49, %v54, %v53
    %vm56 = vcmp.lt.s32.totalorder %v48, 0
    %v57 = vsub.s32 0, %v48
    %v58 = vsel %vm56, %v57, %v48
    %v59 = vshrl.u32 %v58, 4
    %v60 = vand.u32 %v58, 15
    %v61 = vsub.s32 0, %v60
    %v62 = vsel %vm56, %v61, %v60
    %vm63 = vcmp.ne.s32.totalorder %v55, 0
    %vm64 = vcmp.ne.s32.totalorder %v62, 0
    %vm65 = vcmp.lt.s32.totalorder %v55, 0
    %vm66 = vcmp.lt.s32.totalorder %v62, 0
    %vm67 = vmand %vm65, %vm63
    %vm68 = vmand %vm66, %vm64
    %v69 = vadd.s32 %v55, 16
    %v70 = vadd.s32 %v62, 16
    %v71 = vsel %vm67, %v69, %v55
    %v72 = vsel %vm68, %v70, %v62
    %vm73 = vcmp.ge.s32.totalorder %v47, 16
    %vm74 = vcmp.ge.s32.totalorder %v48, 16
    %vm75 = vcmp.ge.s32.totalorder %v71, 1
    %vm76 = vcmp.ge.s32.totalorder %v72, 1
    %vm77 = vmand %vm73, %vm75
    %vm78 = vmand %vm74, %vm76
    %vm79 = vcmp.lt.s32.totalorder %v71, 15
    %vm80 = vcmp.lt.s32.totalorder %v72, 15
    %vm81 = vmand %vm73, %vm79
    %vm82 = vmand %vm74, %vm80
    %vm83 = vcmp.lt.s32.totalorder %v47, 240
    %vm84 = vcmp.lt.s32.totalorder %v48, 240
    %vm85 = vmand %vm83, %vm75
    %vm86 = vmand %vm84, %vm76
    %vm87 = vmand %vm83, %vm79
    %vm88 = vmand %vm84, %vm80
    %v89 = vld [vmem:[%s1] sm:$0x3]
    %v90 = vld [vmem:[%s2] sm:$0xf]
    %v91 = vld [vmem:[%s3] sm:$0x3]
    %v92 = vld [vmem:[%s4] sm:$0xf]
    %v93 = vld [vmem:[%s5] sm:$0xf]
    %v94 = vld [vmem:[%s5 + $0x4] sm:$0xf]
    %v95 = vld [vmem:[%s6] sm:$0xff]
    %v96 = vld [vmem:[%s6 + $0x8] sm:$0xff]
    %v97 = vld [vmem:[%s0] sm:$0xff]
    %v98 = vld [vmem:[%s0 + $0x8] sm:$0xff]
    %v99 = vunpack.c.l.bf16 %v97
    %v100 = vunpack.c.h.bf16 %v97
    %v101 = vunpack.c.l.bf16 %v98
    %v102 = vunpack.c.h.bf16 %v98
    %104 = vset.pattern.permute.xlu0 0
    %105 = vperm.xlu0 %104, %v90
    %v106 = vpop.permute.xlu0 %105
    %v110 = vunpack.c.l.b16 %v97
    %v111 = vunpack.c.h.b16 %v97
    %v112 = vunpack.c.l.b16 %v98
    %v113 = vunpack.c.h.b16 %v98
    %v114 = vpack.c.b16 %v112, %v110
    %v115 = vpack.c.b16 %v113, %v111
    %vm118 = vcmask 130048
    %v120 = vsel %vm118, %v89, 0
    %122 = vmatprep.subr.bf16.mxu0 %v115
    %123 = vmatpush1.bf16.msra.mxu0 %v114
    %124 = vmatprep.subr.bf16.mxu0 0
    %125 = vmatpush1.bf16.msra.mxu0 0
    %126 = vmatprep.subr.bf16.mxu0 0
    %127 = vmatpush1.bf16.msra.mxu0 0
    %128 = vmatprep.subr.bf16.mxu0 0
    %129 = vmatpush1.bf16.msra.mxu0 0
    %130 = vmatprep.subr.bf16.mxu0 0
    %131 = vmatpush1.bf16.msra.mxu0 0
    %132 = vmatprep.subr.bf16.mxu0 0
    %133 = vmatpush1.bf16.msra.mxu0 0
    %134 = vmatprep.subr.bf16.mxu0 0
    %135 = vmatpush1.bf16.msra.mxu0 0
    %136 = vmatprep.subr.bf16.mxu0 0
    %137 = vmatpush1.bf16.msra.mxu0 0
    %138 = vmatprep.subr.bf16.mxu0 0
    %139 = vmatpush1.bf16.msra.mxu0 0
    %140 = vmatprep.subr.bf16.mxu0 0
    %141 = vmatpush1.bf16.msra.mxu0 0
    %142 = vmatprep.subr.bf16.mxu0 0
    %143 = vmatpush1.bf16.msra.mxu0 0
    %144 = vmatprep.subr.bf16.mxu0 0
    %145 = vmatpush1.bf16.msra.mxu0 0
    %146 = vmatprep.subr.bf16.mxu0 0
    %147 = vmatpush1.bf16.msra.mxu0 0
    %148 = vmatprep.subr.bf16.mxu0 0
    %149 = vmatpush1.bf16.msra.mxu0 0
    %150 = vmatprep.subr.bf16.mxu0 0
    %151 = vmatpush1.bf16.msra.mxu0 0
    %152 = vmatprep.subr.bf16.mxu0 0
    %153 = vmatpush1.bf16.msra.mxu0 0
    %154 = vmatprep.mubr.bf16.mxu0 0
    %155 = vmatmul.mubr.bf16.gmra.mrb[0].mxu0 %v120
    %v156 = vpop.f32.mrb[0].mxu0
    %v157 = vadd.f32 %v106, %v156
    %v158 = vpop.f32.mrb[0].mxu0
    %v159 = vadd.f32 %v106, %v158
    %v160 = vpop.f32.mrb[0].mxu0
    %v161 = vpop.f32.mrb[0].mxu0
    %162 = vdwg.mxu0
    %v163 = vmax.f32 %v157, 0.0
    %v164 = vmax.f32 %v159, 0.0
    %165 = vrot.lane.b32.xlu0 %v163, 17
    %v166 = vpop.permute.xlu0 %165
    %167 = vrot.lane.b32.xlu0 %v164, 17
    %v168 = vpop.permute.xlu0 %167
    %vm169 = vcmp.lt.s32.totalorder %v47, 17
    %v170 = vsel %vm169, %v166, %v168
    %v171 = vsel %vm169, %v168, %v166
    %v172 = vsel %vm77, 1, 0
    %v173 = vsel %vm78, 1, 0
    %vm174 = vcmp.eq.s32.totalorder %v172, 1
    %vm175 = vcmp.eq.s32.totalorder %v173, 1
    %v176 = vsel %vm174, %v171, 0.0
    %v177 = vsel %vm175, %v170, 0.0
    %178 = vst [vmem:[#allocation2] sm:$0xf] %v176
    %179 = vst [vmem:[#allocation2 + $0x8] sm:$0xf] %v177
    %180 = vrot.lane.b32.xlu0 %v163, 16
    %v181 = vpop.permute.xlu0 %180
    %182 = vrot.lane.b32.xlu0 %v164, 16
    %v183 = vpop.permute.xlu0 %182
    %vm184 = vcmp.lt.s32.totalorder %v47, 16
    %v185 = vsel %vm184, %v181, %v183
    %v186 = vsel %vm184, %v183, %v181
    %v187 = vsel %vm73, 1, 0
    %v188 = vsel %vm74, 1, 0
    %vm189 = vcmp.eq.s32.totalorder %v187, 1
    %vm190 = vcmp.eq.s32.totalorder %v188, 1
    %v191 = vsel %vm189, %v186, 0.0
    %v192 = vsel %vm190, %v185, 0.0
    %193 = vst [vmem:[#allocation2 + $0x10] sm:$0xf] %v191
    %194 = vst [vmem:[#allocation2 + $0x18] sm:$0xf] %v192
    %195 = vrot.lane.b32.xlu0 %v163, 15
    %v196 = vpop.permute.xlu0 %195
    %197 = vrot.lane.b32.xlu0 %v164, 15
    %v198 = vpop.permute.xlu0 %197
    %vm199 = vcmp.lt.s32.totalorder %v47, 15
    %v200 = vsel %vm199, %v196, %v198
    %v201 = vsel %vm199, %v198, %v196
    %v202 = vsel %vm81, 1, 0
    %v203 = vsel %vm82, 1, 0
    %vm204 = vcmp.eq.s32.totalorder %v202, 1
    %vm205 = vcmp.eq.s32.totalorder %v203, 1
    %v206 = vsel %vm204, %v201, 0.0
    %v207 = vsel %vm205, %v200, 0.0
    %208 = vst [vmem:[#allocation2 + $0x20] sm:$0xf] %v206
    %209 = vst [vmem:[#allocation2 + $0x28] sm:$0xf] %v207
    %210 = vrot.lane.b32.xlu0 %v163, 1
    %v211 = vpop.permute.xlu0 %210
    %212 = vrot.lane.b32.xlu0 %v164, 1
    %v213 = vpop.permute.xlu0 %212
    %vm214 = vcmp.lt.s32.totalorder %v47, 1
    %v215 = vsel %vm214, %v211, %v213
    %v216 = vsel %vm214, %v213, %v211
    %v217 = vsel %vm75, 1, 0
    %v218 = vsel %vm76, 1, 0
    %vm219 = vcmp.eq.s32.totalorder %v217, 1
    %vm220 = vcmp.eq.s32.totalorder %v218, 1
    %v221 = vsel %vm219, %v216, 0.0
    %v222 = vsel %vm220, %v215, 0.0
    %223 = vst [vmem:[#allocation2 + $0x30] sm:$0xf] %v221
    %224 = vst [vmem:[#allocation2 + $0x38] sm:$0xf] %v222
    %225 = vst [vmem:[#allocation2 + $0x40] sm:$0xf] %v163
    %226 = vst [vmem:[#allocation2 + $0x48] sm:$0xf] %v164
    %227 = vrot.lane.b32.xlu0 %v163, 127
    %v228 = vpop.permute.xlu0 %227
    %229 = vrot.lane.b32.xlu0 %v164, 127
    %v230 = vpop.permute.xlu0 %229
    %vm231 = vcmp.lt.s32.totalorder %v47, 127
    %v232 = vsel %vm231, %v228, %v230
    %v233 = vsel %vm231, %v230, %v228
    %v234 = vsel %vm79, 1, 0
    %v235 = vsel %vm80, 1, 0
    %vm236 = vcmp.eq.s32.totalorder %v234, 1
    %vm237 = vcmp.eq.s32.totalorder %v235, 1
    %v238 = vsel %vm236, %v232, 0.0
    %v239 = vsel %vm237, %v233, 0.0
    %240 = vst [vmem:[#allocation2 + $0x50] sm:$0xf] %v238
    %241 = vst [vmem:[#allocation2 + $0x58] sm:$0xf] %v239
    %242 = vrot.lane.b32.xlu0 %v163, 113
    %v243 = vpop.permute.xlu0 %242
    %244 = vrot.lane.b32.xlu0 %v164, 113
    %v245 = vpop.permute.xlu0 %244
    %vm246 = vcmp.lt.s32.totalorder %v47, 113
    %v247 = vsel %vm246, %v243, %v245
    %v248 = vsel %vm246, %v245, %v243
    %v249 = vsel %vm85, 1, 0
    %v250 = vsel %vm86, 1, 0
    %vm251 = vcmp.eq.s32.totalorder %v249, 1
    %vm252 = vcmp.eq.s32.totalorder %v250, 1
    %v253 = vsel %vm251, %v247, 0.0
    %v254 = vsel %vm252, %v248, 0.0
    %255 = vst [vmem:[#allocation2 + $0x60] sm:$0xf] %v253
    %256 = vst [vmem:[#allocation2 + $0x68] sm:$0xf] %v254
    %257 = vrot.lane.b32.xlu0 %v163, 112
    %v258 = vpop.permute.xlu0 %257
    %259 = vrot.lane.b32.xlu0 %v164, 112
    %v260 = vpop.permute.xlu0 %259
    %vm261 = vcmp.lt.s32.totalorder %v47, 112
    %v262 = vsel %vm261, %v258, %v260
    %v263 = vsel %vm261, %v260, %v258
    %v264 = vsel %vm83, 1, 0
    %v265 = vsel %vm84, 1, 0
    %vm266 = vcmp.eq.s32.totalorder %v264, 1
    %vm267 = vcmp.eq.s32.totalorder %v265, 1
    %v268 = vsel %vm266, %v262, 0.0
    %v269 = vsel %vm267, %v263, 0.0
    %270 = vst [vmem:[#allocation2 + $0x70] sm:$0xf] %v268
    %271 = vst [vmem:[#allocation2 + $0x78] sm:$0xf] %v269
    %272 = vrot.lane.b32.xlu0 %v163, 111
    %v273 = vpop.permute.xlu0 %272
    %274 = vrot.lane.b32.xlu0 %v164, 111
    %v275 = vpop.permute.xlu0 %274
    %vm276 = vcmp.lt.s32.totalorder %v47, 111
    %v277 = vsel %vm276, %v273, %v275
    %v278 = vsel %vm276, %v275, %v273
    %v279 = vsel %vm87, 1, 0
    %v280 = vsel %vm88, 1, 0
    %vm281 = vcmp.eq.s32.totalorder %v279, 1
    %vm282 = vcmp.eq.s32.totalorder %v280, 1
    %v283 = vsel %vm281, %v277, 0.0
    %v284 = vsel %vm282, %v278, 0.0
    %285 = vst [vmem:[#allocation2 + $0x80] sm:$0xf] %v283
    %286 = vst [vmem:[#allocation2 + $0x88] sm:$0xf] %v284
    %v287 = vld [vmem:[#allocation2] sm:$0xff]
    %v288 = vld [vmem:[#allocation2 + $0x8] sm:$0xff]
    %v289 = vld [vmem:[#allocation2 + $0x10] sm:$0xff]
    %v290 = vld [vmem:[#allocation2 + $0x18] sm:$0xff]
    %v291 = vld [vmem:[#allocation2 + $0x20] sm:$0xff]
    %v292 = vld [vmem:[#allocation2 + $0x28] sm:$0xff]
    %v293 = vld [vmem:[#allocation2 + $0x30] sm:$0xff]
    %v294 = vld [vmem:[#allocation2 + $0x38] sm:$0xff]
    %v295 = vld [vmem:[#allocation2 + $0x40] sm:$0xff]
    %v296 = vld [vmem:[#allocation2 + $0x48] sm:$0xff]
    %v297 = vld [vmem:[#allocation2 + $0x50] sm:$0xff]
    %v298 = vld [vmem:[#allocation2 + $0x58] sm:$0xff]
    %v299 = vld [vmem:[#allocation2 + $0x60] sm:$0xff]
    %v300 = vld [vmem:[#allocation2 + $0x68] sm:$0xff]
    %v301 = vld [vmem:[#allocation2 + $0x70] sm:$0xff]
    %v302 = vld [vmem:[#allocation2 + $0x78] sm:$0xff]
    %v303 = vld [vmem:[#allocation2 + $0x80] sm:$0xff]
    %v304 = vld [vmem:[#allocation2 + $0x88] sm:$0xff]
    %v305 = vpack.c.bf16 %v289, %v287
    %v306 = vpack.c.bf16 %v290, %v288
    %v307 = vpack.c.bf16 %v293, %v291
    %v308 = vpack.c.bf16 %v294, %v292
    %v309 = vpack.c.bf16 %v297, %v295
    %v310 = vpack.c.bf16 %v298, %v296
    %v311 = vpack.c.bf16 %v301, %v299
    %v312 = vpack.c.bf16 %v302, %v300
    %v313 = vpack.c.bf16 %v303, %v303
    %v314 = vpack.c.bf16 %v304, %v304
    %316 = vset.pattern.permute.xlu0 0
    %317 = vperm.xlu0 %316, %v92
    %v318 = vpop.permute.xlu0 %317
    %vm320 = vcmask 588800
    %v322 = vsel %vm320, %v91, 0
    %vm324 = vcmask 1043456
    %v326 = vsel %vm324, %v313, 0
    %v329 = vsel %vm324, %v314, 0
    %331 = vmatprep.subr.bf16.mxu0 %v306
    %332 = vmatpush1.bf16.msra.mxu0 %v305
    %333 = vmatprep.subr.bf16.mxu0 %v308
    %334 = vmatpush1.bf16.msra.mxu0 %v307
    %335 = vmatprep.subr.bf16.mxu0 %v310
    %336 = vmatpush1.bf16.msra.mxu0 %v309
    %337 = vmatprep.subr.bf16.mxu0 %v312
    %338 = vmatpush1.bf16.msra.mxu0 %v311
    %339 = vmatprep.subr.bf16.mxu0 %v329
    %340 = vmatpush1.bf16.msra.mxu0 %v326
    %341 = vmatprep.subr.bf16.mxu0 0
    %342 = vmatpush1.bf16.msra.mxu0 0
    %343 = vmatprep.subr.bf16.mxu0 0
    %344 = vmatpush1.bf16.msra.mxu0 0
    %345 = vmatprep.subr.bf16.mxu0 0
    %346 = vmatpush1.bf16.msra.mxu0 0
    %347 = vmatprep.subr.bf16.mxu0 0
    %348 = vmatpush1.bf16.msra.mxu0 0
    %349 = vmatprep.subr.bf16.mxu0 0
    %350 = vmatpush1.bf16.msra.mxu0 0
    %351 = vmatprep.subr.bf16.mxu0 0
    %352 = vmatpush1.bf16.msra.mxu0 0
    %353 = vmatprep.subr.bf16.mxu0 0
    %354 = vmatpush1.bf16.msra.mxu0 0
    %355 = vmatprep.subr.bf16.mxu0 0
    %356 = vmatpush1.bf16.msra.mxu0 0
    %357 = vmatprep.subr.bf16.mxu0 0
    %358 = vmatpush1.bf16.msra.mxu0 0
    %359 = vmatprep.subr.bf16.mxu0 0
    %360 = vmatpush1.bf16.msra.mxu0 0
    %361 = vmatprep.subr.bf16.mxu0 0
    %362 = vmatpush1.bf16.msra.mxu0 0
    %363 = vmatprep.mubr.bf16.mxu0 0
    %364 = vmatmul.mubr.bf16.gmra.mrb[0].mxu0 %v322
    %v365 = vpop.f32.mrb[0].mxu0
    %v366 = vadd.f32 %v318, %v365
    %v367 = vpop.f32.mrb[0].mxu0
    %v368 = vadd.f32 %v318, %v367
    %v369 = vpop.f32.mrb[0].mxu0
    %v370 = vpop.f32.mrb[0].mxu0
    %371 = vdwg.mxu0
    %v372 = vmax.f32 %v366, 0.0
    %v373 = vmax.f32 %v368, 0.0
    %v374 = vpack.c.bf16 %v372, %v372
    %v375 = vpack.c.bf16 %v373, %v373
    %377 = vset.pattern.permute.xlu0 0
    %378 = vperm.xlu0 %377, %v95
    %v379 = vpop.permute.xlu0 %378
    %382 = vset.pattern.permute.xlu0 0
    %383 = vperm.xlu0 %382, %v96
    %v384 = vpop.permute.xlu0 %383
    %v388 = vunpack.c.l.b16 %v93
    %v389 = vunpack.c.l.b16 %v94
    %v390 = vpack.c.b16 %v389, %v388
    %vm391 = vcmask 31744
    %v393 = vsel %vm391, %v390, 0
    %vm395 = vcmask 1041408
    %v397 = vsel %vm395, %v374, 0
    %v400 = vsel %vm395, %v375, 0
    %402 = vmatprep.subr.bf16.mxu0 %v400
    %403 = vmatpush1.bf16.msra.mxu0 %v397
    %404 = vmatprep.subr.bf16.mxu0 0
    %405 = vmatpush1.bf16.msra.mxu0 0
    %406 = vmatprep.subr.bf16.mxu0 0
    %407 = vmatpush1.bf16.msra.mxu0 0
    %408 = vmatprep.subr.bf16.mxu0 0
    %409 = vmatpush1.bf16.msra.mxu0 0
    %410 = vmatprep.subr.bf16.mxu0 0
    %411 = vmatpush1.bf16.msra.mxu0 0
    %412 = vmatprep.subr.bf16.mxu0 0
    %413 = vmatpush1.bf16.msra.mxu0 0
    %414 = vmatprep.subr.bf16.mxu0 0
    %415 = vmatpush1.bf16.msra.mxu0 0
    %416 = vmatprep.subr.bf16.mxu0 0
    %417 = vmatpush1.bf16.msra.mxu0 0
    %418 = vmatprep.subr.bf16.mxu0 0
    %419 = vmatpush1.bf16.msra.mxu0 0
    %420 = vmatprep.subr.bf16.mxu0 0
    %421 = vmatpush1.bf16.msra.mxu0 0
    %422 = vmatprep.subr.bf16.mxu0 0
    %423 = vmatpush1.bf16.msra.mxu0 0
    %424 = vmatprep.subr.bf16.mxu0 0
    %425 = vmatpush1.bf16.msra.mxu0 0
    %426 = vmatprep.subr.bf16.mxu0 0
    %427 = vmatpush1.bf16.msra.mxu0 0
    %428 = vmatprep.subr.bf16.mxu0 0
    %429 = vmatpush1.bf16.msra.mxu0 0
    %430 = vmatprep.subr.bf16.mxu0 0
    %431 = vmatpush1.bf16.msra.mxu0 0
    %432 = vmatprep.subr.bf16.mxu0 0
    %433 = vmatpush1.bf16.msra.mxu0 0
    %434 = vmatprep.mubr.bf16.mxu0 0
    %435 = vmatmul.mubr.bf16.gmra.mrb[0].mxu0 %v393
    %v436 = vpop.f32.mrb[0].mxu0
    %v437 = vadd.f32 %v379, %v436
    %v438 = vpop.f32.mrb[0].mxu0
    %v439 = vadd.f32 %v379, %v438
    %v440 = vpop.f32.mrb[0].mxu0
    %v441 = vadd.f32 %v384, %v440
    %v442 = vpop.f32.mrb[0].mxu0
    %v443 = vadd.f32 %v384, %v442
    %444 = vdwg.mxu0
    %v445 = vadd.f32 %v437, %v99
    %v446 = vadd.f32 %v439, %v100
    %v447 = vadd.f32 %v441, %v101
    %v448 = vadd.f32 %v443, %v102
    %v449 = vmax.f32 %v445, 0.0
    %v450 = vmax.f32 %v446, 0.0
    %v451 = vmax.f32 %v447, 0.0
    %v452 = vmax.f32 %v448, 0.0
    %v453 = vpack.c.bf16 %v451, %v449
    %v454 = vpack.c.bf16 %v452, %v450
    %v457 = vunpack.c.l.b16 %v453
    %v458 = vunpack.c.l.b16 %v454
    %v459 = vunpack.c.h.b16 %v453
    %v460 = vunpack.c.h.b16 %v454
    %v461 = vpack.c.b16 %v458, %v457
    %v462 = vpack.c.b16 %v460, %v459
    %465 = vst [vmem:[#allocation3] sm:$0xff] %v461
    %466 = vst [vmem:[#allocation3 + $0x8] sm:$0xff] %v462
    %s467 = scalar_lea.vmem %s0, 16
    %v468 = vld [vmem:[%s467] sm:$0xff]
    %v469 = vld [vmem:[%s467 + $0x8] sm:$0xff]
    %v470 = vunpack.c.l.bf16 %v468
    %v471 = vunpack.c.h.bf16 %v468
    %v472 = vunpack.c.l.bf16 %v469
    %v473 = vunpack.c.h.bf16 %v469
    %v476 = vunpack.c.l.b16 %v468
    %v477 = vunpack.c.h.b16 %v468
    %v478 = vunpack.c.l.b16 %v469
    %v479 = vunpack.c.h.b16 %v469
    %v480 = vpack.c.b16 %v478, %v476
    %v481 = vpack.c.b16 %v479, %v477
    %484 = vmatprep.subr.bf16.mxu0 %v481
    %485 = vmatpush1.bf16.msra.mxu0 %v480
    %486 = vmatprep.subr.bf16.mxu0 0
    %487 = vmatpush1.bf16.msra.mxu0 0
    %488 = vmatprep.subr.bf16.mxu0 0
    %489 = vmatpush1.bf16.msra.mxu0 0
    %490 = vmatprep.subr.bf16.mxu0 0
    %491 = vmatpush1.bf16.msra.mxu0 0
    %492 = vmatprep.subr.bf16.mxu0 0
    %493 = vmatpush1.bf16.msra.mxu0 0
    %494 = vmatprep.subr.bf16.mxu0 0
    %495 = vmatpush1.bf16.msra.mxu0 0
    %496 = vmatprep.subr.bf16.mxu0 0
    %497 = vmatpush1.bf16.msra.mxu0 0
    %498 = vmatprep.subr.bf16.mxu0 0
    %499 = vmatpush1.bf16.msra.mxu0 0
    %500 = vmatprep.subr.bf16.mxu0 0
    %501 = vmatpush1.bf16.msra.mxu0 0
    %502 = vmatprep.subr.bf16.mxu0 0
    %503 = vmatpush1.bf16.msra.mxu0 0
    %504 = vmatprep.subr.bf16.mxu0 0
    %505 = vmatpush1.bf16.msra.mxu0 0
    %506 = vmatprep.subr.bf16.mxu0 0
    %507 = vmatpush1.bf16.msra.mxu0 0
    %508 = vmatprep.subr.bf16.mxu0 0
    %509 = vmatpush1.bf16.msra.mxu0 0
    %510 = vmatprep.subr.bf16.mxu0 0
    %511 = vmatpush1.bf16.msra.mxu0 0
    %512 = vmatprep.subr.bf16.mxu0 0
    %513 = vmatpush1.bf16.msra.mxu0 0
    %514 = vmatprep.subr.bf16.mxu0 0
    %515 = vmatpush1.bf16.msra.mxu0 0
    %516 = vmatprep.mubr.bf16.mxu0 0
    %517 = vmatmul.mubr.bf16.gmra.mrb[0].mxu0 %v120
    %v518 = vpop.f32.mrb[0].mxu0
    %v519 = vadd.f32 %v106, %v518
    %v520 = vpop.f32.mrb[0].mxu0
    %v521 = vadd.f32 %v106, %v520
    %v522 = vpop.f32.mrb[0].mxu0
    %v523 = vpop.f32.mrb[0].mxu0
    %524 = vdwg.mxu0
    %v525 = vmax.f32 %v519, 0.0
    %v526 = vmax.f32 %v521, 0.0
    %527 = vrot.lane.b32.xlu0 %v525, 17
    %v528 = vpop.permute.xlu0 %527
    %529 = vrot.lane.b32.xlu0 %v526, 17
    %v530 = vpop.permute.xlu0 %529
    %v531 = vsel %vm169, %v528, %v530
    %v532 = vsel %vm169, %v530, %v528
    %v533 = vsel %vm174, %v532, 0.0
    %v534 = vsel %vm175, %v531, 0.0
    %535 = vst [vmem:[#allocation2] sm:$0xf] %v533
    %536 = vst [vmem:[#allocation2 + $0x8] sm:$0xf] %v534
    %537 = vrot.lane.b32.xlu0 %v525, 16
    %v538 = vpop.permute.xlu0 %537
    %539 = vrot.lane.b32.xlu0 %v526, 16
    %v540 = vpop.permute.xlu0 %539
    %v541 = vsel %vm184, %v538, %v540
    %v542 = vsel %vm184, %v540, %v538
    %v543 = vsel %vm189, %v542, 0.0
    %v544 = vsel %vm190, %v541, 0.0
    %545 = vst [vmem:[#allocation2 + $0x10] sm:$0xf] %v543
    %546 = vst [vmem:[#allocation2 + $0x18] sm:$0xf] %v544
    %547 = vrot.lane.b32.xlu0 %v525, 15
    %v548 = vpop.permute.xlu0 %547
    %549 = vrot.lane.b32.xlu0 %v526, 15
    %v550 = vpop.permute.xlu0 %549
    %v551 = vsel %vm199, %v548, %v550
    %v552 = vsel %vm199, %v550, %v548
    %v553 = vsel %vm204, %v552, 0.0
    %v554 = vsel %vm205, %v551, 0.0
    %555 = vst [vmem:[#allocation2 + $0x20] sm:$0xf] %v553
    %556 = vst [vmem:[#allocation2 + $0x28] sm:$0xf] %v554
    %557 = vrot.lane.b32.xlu0 %v525, 1
    %v558 = vpop.permute.xlu0 %557
    %559 = vrot.lane.b32.xlu0 %v526, 1
    %v560 = vpop.permute.xlu0 %559
    %v561 = vsel %vm214, %v558, %v560
    %v562 = vsel %vm214, %v560, %v558
    %v563 = vsel %vm219, %v562, 0.0
    %v564 = vsel %vm220, %v561, 0.0
    %565 = vst [vmem:[#allocation2 + $0x30] sm:$0xf] %v563
    %566 = vst [vmem:[#allocation2 + $0x38] sm:$0xf] %v564
    %567 = vst [vmem:[#allocation2 + $0x40] sm:$0xf] %v525
    %568 = vst [vmem:[#allocation2 + $0x48] sm:$0xf] %v526
    %569 = vrot.lane.b32.xlu0 %v525, 127
    %v570 = vpop.permute.xlu0 %569
    %571 = vrot.lane.b32.xlu0 %v526, 127
    %v572 = vpop.permute.xlu0 %571
    %v573 = vsel %vm231, %v570, %v572
    %v574 = vsel %vm231, %v572, %v570
    %v575 = vsel %vm236, %v573, 0.0
    %v576 = vsel %vm237, %v574, 0.0
    %577 = vst [vmem:[#allocation2 + $0x50] sm:$0xf] %v575
    %578 = vst [vmem:[#allocation2 + $0x58] sm:$0xf] %v576
    %579 = vrot.lane.b32.xlu0 %v525, 113
    %v580 = vpop.permute.xlu0 %579
    %581 = vrot.lane.b32.xlu0 %v526, 113
    %v582 = vpop.permute.xlu0 %581
    %v583 = vsel %vm246, %v580, %v582
    %v584 = vsel %vm246, %v582, %v580
    %v585 = vsel %vm251, %v583, 0.0
    %v586 = vsel %vm252, %v584, 0.0
    %587 = vst [vmem:[#allocation2 + $0x60] sm:$0xf] %v585
    %588 = vst [vmem:[#allocation2 + $0x68] sm:$0xf] %v586
    %589 = vrot.lane.b32.xlu0 %v525, 112
    %v590 = vpop.permute.xlu0 %589
    %591 = vrot.lane.b32.xlu0 %v526, 112
    %v592 = vpop.permute.xlu0 %591
    %v593 = vsel %vm261, %v590, %v592
    %v594 = vsel %vm261, %v592, %v590
    %v595 = vsel %vm266, %v593, 0.0
    %v596 = vsel %vm267, %v594, 0.0
    %597 = vst [vmem:[#allocation2 + $0x70] sm:$0xf] %v595
    %598 = vst [vmem:[#allocation2 + $0x78] sm:$0xf] %v596
    %599 = vrot.lane.b32.xlu0 %v525, 111
    %v600 = vpop.permute.xlu0 %599
    %601 = vrot.lane.b32.xlu0 %v526, 111
    %v602 = vpop.permute.xlu0 %601
    %v603 = vsel %vm276, %v600, %v602
    %v604 = vsel %vm276, %v602, %v600
    %v605 = vsel %vm281, %v603, 0.0
    %v606 = vsel %vm282, %v604, 0.0
    %607 = vst [vmem:[#allocation2 + $0x80] sm:$0xf] %v605
    %608 = vst [vmem:[#allocation2 + $0x88] sm:$0xf] %v606
    %v609 = vld [vmem:[#allocation2] sm:$0xff]
    %v610 = vld [vmem:[#allocation2 + $0x8] sm:$0xff]
    %v611 = vld [vmem:[#allocation2 + $0x10] sm:$0xff]
    %v612 = vld [vmem:[#allocation2 + $0x18] sm:$0xff]
    %v613 = vld [vmem:[#allocation2 + $0x20] sm:$0xff]
    %v614 = vld [vmem:[#allocation2 + $0x28] sm:$0xff]
    %v615 = vld [vmem:[#allocation2 + $0x30] sm:$0xff]
    %v616 = vld [vmem:[#allocation2 + $0x38] sm:$0xff]
    %v617 = vld [vmem:[#allocation2 + $0x40] sm:$0xff]
    %v618 = vld [vmem:[#allocation2 + $0x48] sm:$0xff]
    %v619 = vld [vmem:[#allocation2 + $0x50] sm:$0xff]
    %v620 = vld [vmem:[#allocation2 + $0x58] sm:$0xff]
    %v621 = vld [vmem:[#allocation2 + $0x60] sm:$0xff]
    %v622 = vld [vmem:[#allocation2 + $0x68] sm:$0xff]
    %v623 = vld [vmem:[#allocation2 + $0x70] sm:$0xff]
    %v624 = vld [vmem:[#allocation2 + $0x78] sm:$0xff]
    %v625 = vld [vmem:[#allocation2 + $0x80] sm:$0xff]
    %v626 = vld [vmem:[#allocation2 + $0x88] sm:$0xff]
    %v627 = vpack.c.bf16 %v611, %v609
    %v628 = vpack.c.bf16 %v612, %v610
    %v629 = vpack.c.bf16 %v615, %v613
    %v630 = vpack.c.bf16 %v616, %v614
    %v631 = vpack.c.bf16 %v619, %v617
    %v632 = vpack.c.bf16 %v620, %v618
    %v633 = vpack.c.bf16 %v623, %v621
    %v634 = vpack.c.bf16 %v624, %v622
    %v635 = vpack.c.bf16 %v625, %v625
    %v636 = vpack.c.bf16 %v626, %v626
    %v638 = vsel %vm324, %v635, 0
    %v641 = vsel %vm324, %v636, 0
    %643 = vmatprep.subr.bf16.mxu0 %v628
    %644 = vmatpush1.bf16.msra.mxu0 %v627
    %645 = vmatprep.subr.bf16.mxu0 %v630
    %646 = vmatpush1.bf16.msra.mxu0 %v629
    %647 = vmatprep.subr.bf16.mxu0 %v632
    %648 = vmatpush1.bf16.msra.mxu0 %v631
    %649 = vmatprep.subr.bf16.mxu0 %v634
    %650 = vmatpush1.bf16.msra.mxu0 %v633
    %651 = vmatprep.subr.bf16.mxu0 %v641
    %652 = vmatpush1.bf16.msra.mxu0 %v638
    %653 = vmatprep.subr.bf16.mxu0 0
    %654 = vmatpush1.bf16.msra.mxu0 0
    %655 = vmatprep.subr.bf16.mxu0 0
    %656 = vmatpush1.bf16.msra.mxu0 0
    %657 = vmatprep.subr.bf16.mxu0 0
    %658 = vmatpush1.bf16.msra.mxu0 0
    %659 = vmatprep.subr.bf16.mxu0 0
    %660 = vmatpush1.bf16.msra.mxu0 0
    %661 = vmatprep.subr.bf16.mxu0 0
    %662 = vmatpush1.bf16.msra.mxu0 0
    %663 = vmatprep.subr.bf16.mxu0 0
    %664 = vmatpush1.bf16.msra.mxu0 0
    %665 = vmatprep.subr.bf16.mxu0 0
    %666 = vmatpush1.bf16.msra.mxu0 0
    %667 = vmatprep.subr.bf16.mxu0 0
    %668 = vmatpush1.bf16.msra.mxu0 0
    %669 = vmatprep.subr.bf16.mxu0 0
    %670 = vmatpush1.bf16.msra.mxu0 0
    %671 = vmatprep.subr.bf16.mxu0 0
    %672 = vmatpush1.bf16.msra.mxu0 0
    %673 = vmatprep.subr.bf16.mxu0 0
    %674 = vmatpush1.bf16.msra.mxu0 0
    %675 = vmatprep.mubr.bf16.mxu0 0
    %676 = vmatmul.mubr.bf16.gmra.mrb[0].mxu0 %v322
    %v677 = vpop.f32.mrb[0].mxu0
    %v678 = vadd.f32 %v318, %v677
    %v679 = vpop.f32.mrb[0].mxu0
    %v680 = vadd.f32 %v318, %v679
    %v681 = vpop.f32.mrb[0].mxu0
    %v682 = vpop.f32.mrb[0].mxu0
    %683 = vdwg.mxu0
    %v684 = vmax.f32 %v678, 0.0
    %v685 = vmax.f32 %v680, 0.0
    %v686 = vpack.c.bf16 %v684, %v684
    %v687 = vpack.c.bf16 %v685, %v685
    %v689 = vsel %vm395, %v686, 0
    %v692 = vsel %vm395, %v687, 0
    %694 = vmatprep.subr.bf16.mxu0 %v692
    %695 = vmatpush1.bf16.msra.mxu0 %v689
    %696 = vmatprep.subr.bf16.mxu0 0
    %697 = vmatpush1.bf16.msra.mxu0 0
    %698 = vmatprep.subr.bf16.mxu0 0
    %699 = vmatpush1.bf16.msra.mxu0 0
    %700 = vmatprep.subr.bf16.mxu0 0
    %701 = vmatpush1.bf16.msra.mxu0 0
    %702 = vmatprep.subr.bf16.mxu0 0
    %703 = vmatpush1.bf16.msra.mxu0 0
    %704 = vmatprep.subr.bf16.mxu0 0
    %705 = vmatpush1.bf16.msra.mxu0 0
    %706 = vmatprep.subr.bf16.mxu0 0
    %707 = vmatpush1.bf16.msra.mxu0 0
    %708 = vmatprep.subr.bf16.mxu0 0
    %709 = vmatpush1.bf16.msra.mxu0 0
    %710 = vmatprep.subr.bf16.mxu0 0
    %711 = vmatpush1.bf16.msra.mxu0 0
    %712 = vmatprep.subr.bf16.mxu0 0
    %713 = vmatpush1.bf16.msra.mxu0 0
    %714 = vmatprep.subr.bf16.mxu0 0
    %715 = vmatpush1.bf16.msra.mxu0 0
    %716 = vmatprep.subr.bf16.mxu0 0
    %717 = vmatpush1.bf16.msra.mxu0 0
    %718 = vmatprep.subr.bf16.mxu0 0
    %719 = vmatpush1.bf16.msra.mxu0 0
    %720 = vmatprep.subr.bf16.mxu0 0
    %721 = vmatpush1.bf16.msra.mxu0 0
    %722 = vmatprep.subr.bf16.mxu0 0
    %723 = vmatpush1.bf16.msra.mxu0 0
    %724 = vmatprep.subr.bf16.mxu0 0
    %725 = vmatpush1.bf16.msra.mxu0 0
    %726 = vmatprep.mubr.bf16.mxu0 0
    %727 = vmatmul.mubr.bf16.gmra.mrb[0].mxu0 %v393
    %v728 = vpop.f32.mrb[0].mxu0
    %v729 = vadd.f32 %v379, %v728
    %v730 = vpop.f32.mrb[0].mxu0
    %v731 = vadd.f32 %v379, %v730
    %v732 = vpop.f32.mrb[0].mxu0
    %v733 = vadd.f32 %v384, %v732
    %v734 = vpop.f32.mrb[0].mxu0
    %v735 = vadd.f32 %v384, %v734
    %736 = vdwg.mxu0
    %v737 = vadd.f32 %v729, %v470
    %v738 = vadd.f32 %v731, %v471
    %v739 = vadd.f32 %v733, %v472
    %v740 = vadd.f32 %v735, %v473
    %v741 = vmax.f32 %v737, 0.0
    %v742 = vmax.f32 %v738, 0.0
    %v743 = vmax.f32 %v739, 0.0
    %v744 = vmax.f32 %v740, 0.0
    %v745 = vpack.c.bf16 %v743, %v741
    %v746 = vpack.c.bf16 %v744, %v742
    %v749 = vunpack.c.l.b16 %v745
    %v750 = vunpack.c.l.b16 %v746
    %v751 = vunpack.c.h.b16 %v745
    %v752 = vunpack.c.h.b16 %v746
    %v753 = vpack.c.b16 %v750, %v749
    %v754 = vpack.c.b16 %v752, %v751
    %s757 = scalar_lea.vmem [#allocation3], 16
    %758 = vst [vmem:[%s757] sm:$0xff] %v753
    %759 = vst [vmem:[%s757 + $0x8] sm:$0xff] %v754
    // Predicated region
    $region30: #{tpu_custom_call.1} parent=1 // pred_check
      _
    $region31: #{tpu_custom_call.1} parent=1 // pred_check_branch
      %761 = sbr.rel (0) target = $region33
    $region32: #{tpu_custom_call.1} parent=1 // pred_region
      %s763 = ssub.s32 512, 512
      %764 = vsyncadd [#allocation4], %s763
      %s765 = sshll.u32 [#allocation3], 4
      %s766 = int_to_ptr.vmem [resolvable:$true] %s765
      %771 = dma.vmem_to_hbm [thread:$0]  %s766, 512, %s7, [#allocation4], 128, 128, 8
    $region33: #{tpu_custom_call.1} parent=1 // pred_fallthru
      _
    // Predicated region
    $region34: #{tpu_custom_call.1} parent=1 // pred_check
      _
    $region35: #{tpu_custom_call.1} parent=1 // pred_check_branch
      %773 = sbr.rel (0) target = $region37
    $region36: #{tpu_custom_call.1} parent=1 // pred_region
      %774 = dma.done [#allocation4], 512
    $region37: #{tpu_custom_call.1} parent=1 // pred_fallthru
      _
    %775 = vsyncpa [#allocation4], 1

</llo_original>
